<compile_context>
chip_gen: v7x
topology: tpu7x:2x2x1
jax: 0.10.0
libtpu: 0.0.40
codegen_flags: <defaults>
</compile_context>

<pallas_src>
import functools

import jax
import jax.numpy as jnp
from jax.experimental import pallas as pl
from jax.experimental.pallas import tpu as pltpu


def _round_up(x, m):
    return (x + m - 1) // m * m


def _selfcon_colsum_kernel(counts_ref,           # SMEM (3,) int32: [Na, Np, Nn]
                           a_ref, p_ref, n_ref,  # VMEM (TM, D) row tiles
                           out_ref,              # VMEM (1, 3, 8, D) f32 partial sums
                           *, use_mxu_ssq):
    split = pl.program_id(0)                 # parallel axis (TensorCore split)
    step = pl.program_id(1)                  # arbitrary axis (row-tile reduction)
    tiles_per_split = pl.num_programs(1)
    tm, d = a_ref.shape

    @pl.when(step == 0)
    def _init():
        out_ref[...] = jnp.zeros_like(out_ref)

    # Global row ids of this tile (from the *unclamped* tile index), used to mask
    # rows past each input's true row count, including unspecified OOB rows of the
    # last partial tile (no wrapper padding anymore).
    g = split * tiles_per_split + step
    row_ids = g * tm + jax.lax.broadcasted_iota(jnp.int32, (tm, 1), 0)

    if use_mxu_ssq:
        ones_col = jnp.ones((d, 1), jnp.float32)

    def colsum_normalized(x_ref, n_valid):
        valid = row_ids < n_valid                                     # (TM, 1)
        # Mask the data itself: OOB tile contents are unspecified and NaN * 0 = NaN
        # would otherwise poison the column sums.
        x = jnp.where(valid, x_ref[...].astype(jnp.float32), 0.0)     # (TM, D)
        if use_mxu_ssq:
            # Lane reduce on the idle MXU (one vmatmul push per LHS vreg) instead of
            # the XLU rotate/reduce tree that shares the vector-extended issue slots.
            ssq = jnp.dot(x * x, ones_col,
                          preferred_element_type=jnp.float32)         # (TM, 1)
        else:
            ssq = jnp.sum(x * x, axis=-1, keepdims=True)              # (TM, 1)
        # rsqrt on EUP; masked rows see ssq=1 so no rsqrt(0) garbage (all-zero
        # *valid* rows still give inf/NaN, matching the reference's 0/0 behavior).
        inv_norm = jax.lax.rsqrt(jnp.where(valid, ssq, 1.0))
        x_hat = x * inv_norm                                          # masked rows stay 0
        # Sublane-wide partial column sums: pure VPU vreg adds in the hot loop;
        # the 8 -> 1 sublane fold happens once, in the JAX wrapper.
        return jnp.sum(x_hat.reshape(tm // 8, 8, d), axis=0)          # (8, D)

    out_ref[0, 0] += colsum_normalized(a_ref, counts_ref[0])
    out_ref[0, 1] += colsum_normalized(p_ref, counts_ref[1])
    out_ref[0, 2] += colsum_normalized(n_ref, counts_ref[2])


def selfcon_loss(anchor, pos, neg, *, block_rows=2048, num_core_splits=2):
    """Pallas TPU implementation of SelfConLoss.forward. Returns scalar f32."""
    if anchor.ndim != 2 or pos.ndim != 2 or neg.ndim != 2:
        raise ValueError("anchor/pos/neg must be 2-D [N, D]")
    d = anchor.shape[1]
    if pos.shape[1] != d or neg.shape[1] != d:
        raise ValueError("feature dimensions must match")
    if pos.shape[0] != neg.shape[0]:
        raise ValueError("`dn - dp` requires pos and neg to have the same row count")

    na, npos, nneg = anchor.shape[0], pos.shape[0], neg.shape[0]
    max_n = max(na, npos, nneg)

    itemsize = max(jnp.dtype(anchor.dtype).itemsize,
                   jnp.dtype(pos.dtype).itemsize,
                   jnp.dtype(neg.dtype).itemsize)

    # Generation-aware VMEM budget: stay within the default scoped limit (16 MiB on
    # v5e) and never above ~1/4 of physical VMEM (v7x only has 64 MiB physical).
    try:
        vmem_physical = int(pltpu.get_tpu_info().vmem_capacity_bytes)
    except Exception:
        vmem_physical = 64 * 1024 * 1024          # conservative (v7x) fallback
    vmem_budget = min(16 * 1024 * 1024, vmem_physical // 4)
    # 3 inputs x 2 pipeline buffers in the input dtype + ~3 tile-sized f32
    # temporaries for the masked/normalized intermediates inside the body.
    per_row_bytes = 3 * d * (2 * itemsize + 4)
    tm_cap = max(8, (vmem_budget // per_row_bytes) // 8 * 8)
    tm = min(_round_up(block_rows, 8), tm_cap, _round_up(max_n, 8))

    n_tiles = pl.cdiv(max_n, tm)
    n_splits = max(1, min(num_core_splits, n_tiles))   # v7x: one split per TensorCore
    tiles_per_split = pl.cdiv(n_tiles, n_splits)

    # Per-input clamp: a shorter input never DMAs a block starting past its rows;
    # fully-out-of-range tiles contribute nothing thanks to the in-kernel row mask.
    def make_index_map(rows):
        last_tile = max(pl.cdiv(rows, tm) - 1, 0)

        def index_map(split, step, counts):
            return (jnp.minimum(split * tiles_per_split + step, last_tile), 0)

        return index_map

    counts = jnp.array([na, npos, nneg], dtype=jnp.int32)
    use_mxu_ssq = d <= 512

    total_rows = na + npos + nneg
    cost = pl.CostEstimate(
        flops=int(4 * total_rows * d),                 # square + reduce + scale + acc
        transcendentals=int(total_rows),               # one rsqrt per row
        bytes_accessed=int((anchor.size + pos.size + neg.size) * itemsize
                           + n_splits * 3 * 8 * d * 4),
    )

    grid_spec = pltpu.PrefetchScalarGridSpec(
        num_scalar_prefetch=1,
        grid=(n_splits, tiles_per_split),
        in_specs=[
            pl.BlockSpec((tm, d), make_index_map(na)),
            pl.BlockSpec((tm, d), make_index_map(npos)),
            pl.BlockSpec((tm, d), make_index_map(nneg)),
        ],
        # One (3, 8, D) partial-sum slab per split; resident across the reduction
        # axis (same block index for every `step`), acts as the accumulator.
        out_specs=pl.BlockSpec((1, 3, 8, d),
                               lambda split, step, counts: (split, 0, 0, 0)),
    )

    partial_sums = pl.pallas_call(
        functools.partial(_selfcon_colsum_kernel, use_mxu_ssq=use_mxu_ssq),
        out_shape=jax.ShapeDtypeStruct((n_splits, 3, 8, d), jnp.float32),
        grid_spec=grid_spec,
        compiler_params=pltpu.CompilerParams(
            dimension_semantics=("parallel", "arbitrary"),
            vmem_limit_bytes=int(min(vmem_physical // 2, 32 * 1024 * 1024)),
        ),
        cost_estimate=cost,
    )(counts, anchor, pos, neg)

    # Tiny finalize in plain JAX: fold splits + sublanes, two length-D dots, + 2.
    col_sums = jnp.sum(partial_sums, axis=(0, 2))      # (3, D) f32
    sa, sp, sn = col_sums[0], col_sums[1], col_sums[2]
    mean_dp = jnp.sum(sa * sp) / (na * npos)
    mean_dn = jnp.sum(sa * sn) / (na * nneg)
    return (mean_dn - mean_dp + 2.0).astype(jnp.float32)


def _reference(anchor, pos, neg):
    hi = jax.lax.Precision.HIGHEST
    a = anchor / jnp.linalg.norm(anchor, axis=-1, keepdims=True)
    p = pos / jnp.linalg.norm(pos, axis=-1, keepdims=True)
    n = neg / jnp.linalg.norm(neg, axis=-1, keepdims=True)
    dp = jnp.matmul(a.astype(jnp.float32), p.T.astype(jnp.float32), precision=hi)
    dn = jnp.matmul(a.astype(jnp.float32), n.T.astype(jnp.float32), precision=hi)
    return jnp.mean(dn - dp + 2.0)


if __name__ == "__main__":
    key = jax.random.PRNGKey(0)
    k1, k2, k3 = jax.random.split(key, 3)

    # Small deterministic inputs consistent with the module: flat [N, D] embeddings.
    N, D = 8, 128
    anchor = jax.random.normal(k1, (N, D), dtype=jnp.float32)
    pos = jax.random.normal(k2, (N, D), dtype=jnp.float32)
    neg = jax.random.normal(k3, (N, D), dtype=jnp.float32)

    loss = jax.block_until_ready(selfcon_loss(anchor, pos, neg))
    ref = jax.block_until_ready(_reference(anchor, pos, neg))
    assert jnp.allclose(loss, ref, atol=1e-4, rtol=1e-4), (loss, ref)

    # Ragged last tile (N not a multiple of the tile) + both grid splits, no padding.
    N2 = 12
    a2 = jax.random.normal(jax.random.PRNGKey(1), (N2, D), dtype=jnp.float32)
    p2 = jax.random.normal(jax.random.PRNGKey(2), (N2, D), dtype=jnp.float32)
    n2 = jax.random.normal(jax.random.PRNGKey(3), (N2, D), dtype=jnp.float32)
    loss2 = jax.block_until_ready(selfcon_loss(a2, p2, n2, block_rows=8))
    ref2 = jax.block_until_ready(_reference(a2, p2, n2))
    assert jnp.allclose(loss2, ref2, atol=1e-4, rtol=1e-4), (loss2, ref2)

    # Differing row counts (Na != Np == Nn): exercises per-input index-map clamping
    # and multi-step accumulation along the reduction axis of each split.
    a3 = jax.random.normal(jax.random.PRNGKey(4), (24, D), dtype=jnp.float32)
    p3 = jax.random.normal(jax.random.PRNGKey(5), (40, D), dtype=jnp.float32)
    n3 = jax.random.normal(jax.random.PRNGKey(6), (40, D), dtype=jnp.float32)
    loss3 = jax.block_until_ready(selfcon_loss(a3, p3, n3, block_rows=8))
    ref3 = jax.block_until_ready(_reference(a3, p3, n3))
    assert jnp.allclose(loss3, ref3, atol=1e-4, rtol=1e-4), (loss3, ref3)

    # Large D: exercises the XLU (non-MXU) sum-of-squares path.
    D4 = 1024
    a4 = jax.random.normal(jax.random.PRNGKey(7), (8, D4), dtype=jnp.float32)
    p4 = jax.random.normal(jax.random.PRNGKey(8), (8, D4), dtype=jnp.float32)
    n4 = jax.random.normal(jax.random.PRNGKey(9), (8, D4), dtype=jnp.float32)
    loss4 = jax.block_until_ready(selfcon_loss(a4, p4, n4))
    ref4 = jax.block_until_ready(_reference(a4, p4, n4))
    assert jnp.allclose(loss4, ref4, atol=1e-4, rtol=1e-4), (loss4, ref4)

    print("KERNEL_OK")
</pallas_src>

<mosaic_0001>
module attributes {stable_mosaic.version = 11 : i64} {
  func.func @_selfcon_colsum_kernel(%arg0: i32, %arg1: i32, %arg2: memref<3xi32, #tpu.memory_space<smem>>, %arg3: memref<8x128xf32, #tpu.memory_space<vmem>>, %arg4: memref<8x128xf32, #tpu.memory_space<vmem>>, %arg5: memref<8x128xf32, #tpu.memory_space<vmem>>, %arg6: memref<1x3x8x128xf32, #tpu.memory_space<vmem>>) attributes {dimension_semantics = [#tpu.dimension_semantics<parallel>, #tpu.dimension_semantics<arbitrary>], iteration_bounds = array<i64: 1, 1>, scalar_prefetch = 1 : i64, scratch_operands = 0 : i64, tpu.core_type = #tpu.core_type<tc>, window_params = [{transform_indices = @transform_0, window_bounds = array<i64: 8, 128>}, {transform_indices = @transform_1, window_bounds = array<i64: 8, 128>}, {transform_indices = @transform_2, window_bounds = array<i64: 8, 128>}, {transform_indices = @transform_3, window_bounds = array<i64: 1, 3, 8, 128>}]} {
    %c0_i32 = arith.constant 0 : i32
    %0 = arith.cmpi eq, %arg1, %c0_i32 : i32
    %1 = arith.extui %0 : i1 to i32
    %c0_i32_0 = arith.constant 0 : i32
    %2 = arith.cmpi ne, %1, %c0_i32_0 : i32
    scf.if %2 {
      %cst_43 = arith.constant 0.000000e+00 : f32
      %79 = vector.broadcast %cst_43 : f32 to vector<1x3x8x128xf32>
      %c0_44 = arith.constant 0 : index
      %c0_45 = arith.constant 0 : index
      %c0_46 = arith.constant 0 : index
      %c0_47 = arith.constant 0 : index
      %80 = vector.load %arg6[%c0_44, %c0_45, %c0_46, %c0_47] : memref<1x3x8x128xf32, #tpu.memory_space<vmem>>, vector<1x3x8x128xf32>
      tpu.vector_store %arg6[%c0_44, %c0_45, %c0_46, %c0_47], %79 {strides = array<i32>} : memref<1x3x8x128xf32, #tpu.memory_space<vmem>>, vector<1x3x8x128xf32>,
    } else {
    }
    %c1_i32 = arith.constant 1 : i32
    %3 = arith.muli %arg0, %c1_i32 : i32
    %4 = arith.addi %3, %arg1 : i32
    %c8_i32 = arith.constant 8 : i32
    %5 = arith.muli %4, %c8_i32 : i32
    %6 = tpu.iota {dimensions = array<i32: 0>} : vector<8x1xi32>
    %7 = vector.broadcast %5 : i32 to vector<8x1xi32>
    %8 = arith.addi %7, %6 : vector<8x1xi32>
    %cst = arith.constant 1.000000e+00 : f32
    %9 = vector.broadcast %cst : f32 to vector<128x1xf32>
    %c0 = arith.constant 0 : index
    %c0_1 = arith.constant 0 : index
    %c0_2 = arith.constant 0 : index
    %c0_3 = arith.constant 0 : index
    %10 = vector.load %arg6[%c0, %c0_1, %c0_2, %c0_3] : memref<1x3x8x128xf32, #tpu.memory_space<vmem>>, vector<1x1x8x128xf32>
    %11 = vector.shape_cast %10 : vector<1x1x8x128xf32> to vector<8x128xf32>
    %c0_4 = arith.constant 0 : index
    %12 = memref.load %arg2[%c0_4] : memref<3xi32, #tpu.memory_space<smem>>
    %13 = vector.broadcast %12 : i32 to vector<8x1xi32>
    %14 = arith.cmpi slt, %8, %13 : vector<8x1xi32>
    %c0_5 = arith.constant 0 : index
    %c0_6 = arith.constant 0 : index
    %15 = vector.load %arg3[%c0_5, %c0_6] : memref<8x128xf32, #tpu.memory_space<vmem>>, vector<8x128xf32>
    %cst_7 = arith.constant 0.000000e+00 : f32
    %16 = vector.shape_cast %14 : vector<8x1xi1> to vector<8x1xi1>
    %17 = vector.broadcast %16 : vector<8x1xi1> to vector<8x128xi1>
    %18 = vector.broadcast %cst_7 : f32 to vector<8x128xf32>
    %19 = arith.select %17, %15, %18 : vector<8x128xi1>, vector<8x128xf32>
    %20 = arith.mulf %19, %19 : vector<8x128xf32>
    %cst_8 = arith.constant dense<0.000000e+00> : vector<8x1xf32>
    %21 = tpu.matmul %20, %9, %cst_8 {dimension_numbers = #tpu.dot_dimension_numbers<[1], [0], [0], [1], [0, 0, 1, 1], [], []>} : vector<8x128xf32>, vector<128x1xf32>, vector<8x1xf32> -> vector<8x1xf32>
    %cst_9 = arith.constant 1.000000e+00 : f32
    %22 = vector.broadcast %cst_9 : f32 to vector<8x1xf32>
    %23 = arith.select %14, %21, %22 : vector<8x1xi1>, vector<8x1xf32>
    %24 = math.rsqrt %23 : vector<8x1xf32>
    %25 = vector.broadcast %24 : vector<8x1xf32> to vector<8x128xf32>
    %26 = arith.mulf %19, %25 : vector<8x128xf32>
    %27 = vector.shape_cast %26 : vector<8x128xf32> to vector<1x8x128xf32>
    %cst_10 = arith.constant dense<0.000000e+00> : vector<8x128xf32>
    %28 = vector.multi_reduction <add>, %27, %cst_10 [0] : vector<1x8x128xf32> to vector<8x128xf32>
    %29 = arith.addf %11, %28 : vector<8x128xf32>
    %c0_11 = arith.constant 0 : index
    %c0_12 = arith.constant 0 : index
    %c0_13 = arith.constant 0 : index
    %c0_14 = arith.constant 0 : index
    %30 = vector.load %arg6[%c0_11, %c0_12, %c0_13, %c0_14] : memref<1x3x8x128xf32, #tpu.memory_space<vmem>>, vector<1x1x8x128xf32>
    %31 = vector.shape_cast %30 : vector<1x1x8x128xf32> to vector<8x128xf32>
    %32 = vector.shape_cast %29 : vector<8x128xf32> to vector<1x1x8x128xf32>
    tpu.vector_store %arg6[%c0_11, %c0_12, %c0_13, %c0_14], %32 {strides = array<i32>} : memref<1x3x8x128xf32, #tpu.memory_space<vmem>>, vector<1x1x8x128xf32>,
    %c0_15 = arith.constant 0 : index
    %c1 = arith.constant 1 : index
    %c0_16 = arith.constant 0 : index
    %c0_17 = arith.constant 0 : index
    %33 = vector.load %arg6[%c0_15, %c1, %c0_16, %c0_17] : memref<1x3x8x128xf32, #tpu.memory_space<vmem>>, vector<1x1x8x128xf32>
    %34 = vector.shape_cast %33 : vector<1x1x8x128xf32> to vector<8x128xf32>
    %c1_18 = arith.constant 1 : index
    %35 = memref.load %arg2[%c1_18] : memref<3xi32, #tpu.memory_space<smem>>
    %36 = vector.broadcast %35 : i32 to vector<8x1xi32>
    %37 = arith.cmpi slt, %8, %36 : vector<8x1xi32>
    %c0_19 = arith.constant 0 : index
    %c0_20 = arith.constant 0 : index
    %38 = vector.load %arg4[%c0_19, %c0_20] : memref<8x128xf32, #tpu.memory_space<vmem>>, vector<8x128xf32>
    %cst_21 = arith.constant 0.000000e+00 : f32
    %39 = vector.shape_cast %37 : vector<8x1xi1> to vector<8x1xi1>
    %40 = vector.broadcast %39 : vector<8x1xi1> to vector<8x128xi1>
    %41 = vector.broadcast %cst_21 : f32 to vector<8x128xf32>
    %42 = arith.select %40, %38, %41 : vector<8x128xi1>, vector<8x128xf32>
    %43 = arith.mulf %42, %42 : vector<8x128xf32>
    %cst_22 = arith.constant dense<0.000000e+00> : vector<8x1xf32>
    %44 = tpu.matmul %43, %9, %cst_22 {dimension_numbers = #tpu.dot_dimension_numbers<[1], [0], [0], [1], [0, 0, 1, 1], [], []>} : vector<8x128xf32>, vector<128x1xf32>, vector<8x1xf32> -> vector<8x1xf32>
    %cst_23 = arith.constant 1.000000e+00 : f32
    %45 = vector.broadcast %cst_23 : f32 to vector<8x1xf32>
    %46 = arith.select %37, %44, %45 : vector<8x1xi1>, vector<8x1xf32>
    %47 = math.rsqrt %46 : vector<8x1xf32>
    %48 = vector.broadcast %47 : vector<8x1xf32> to vector<8x128xf32>
    %49 = arith.mulf %42, %48 : vector<8x128xf32>
    %50 = vector.shape_cast %49 : vector<8x128xf32> to vector<1x8x128xf32>
    %cst_24 = arith.constant dense<0.000000e+00> : vector<8x128xf32>
    %51 = vector.multi_reduction <add>, %50, %cst_24 [0] : vector<1x8x128xf32> to vector<8x128xf32>
    %52 = arith.addf %34, %51 : vector<8x128xf32>
    %c0_25 = arith.constant 0 : index
    %c1_26 = arith.constant 1 : index
    %c0_27 = arith.constant 0 : index
    %c0_28 = arith.constant 0 : index
    %53 = vector.load %arg6[%c0_25, %c1_26, %c0_27, %c0_28] : memref<1x3x8x128xf32, #tpu.memory_space<vmem>>, vector<1x1x8x128xf32>
    %54 = vector.shape_cast %53 : vector<1x1x8x128xf32> to vector<8x128xf32>
    %55 = vector.shape_cast %52 : vector<8x128xf32> to vector<1x1x8x128xf32>
    tpu.vector_store %arg6[%c0_25, %c1_26, %c0_27, %c0_28], %55 {strides = array<i32>} : memref<1x3x8x128xf32, #tpu.memory_space<vmem>>, vector<1x1x8x128xf32>,
    %c0_29 = arith.constant 0 : index
    %c2 = arith.constant 2 : index
    %c0_30 = arith.constant 0 : index
    %c0_31 = arith.constant 0 : index
    %56 = vector.load %arg6[%c0_29, %c2, %c0_30, %c0_31] : memref<1x3x8x128xf32, #tpu.memory_space<vmem>>, vector<1x1x8x128xf32>
    %57 = vector.shape_cast %56 : vector<1x1x8x128xf32> to vector<8x128xf32>
    %c2_32 = arith.constant 2 : index
    %58 = memref.load %arg2[%c2_32] : memref<3xi32, #tpu.memory_space<smem>>
    %59 = vector.broadcast %58 : i32 to vector<8x1xi32>
    %60 = arith.cmpi slt, %8, %59 : vector<8x1xi32>
    %c0_33 = arith.constant 0 : index
    %c0_34 = arith.constant 0 : index
    %61 = vector.load %arg5[%c0_33, %c0_34] : memref<8x128xf32, #tpu.memory_space<vmem>>, vector<8x128xf32>
    %cst_35 = arith.constant 0.000000e+00 : f32
    %62 = vector.shape_cast %60 : vector<8x1xi1> to vector<8x1xi1>
    %63 = vector.broadcast %62 : vector<8x1xi1> to vector<8x128xi1>
    %64 = vector.broadcast %cst_35 : f32 to vector<8x128xf32>
    %65 = arith.select %63, %61, %64 : vector<8x128xi1>, vector<8x128xf32>
    %66 = arith.mulf %65, %65 : vector<8x128xf32>
    %cst_36 = arith.constant dense<0.000000e+00> : vector<8x1xf32>
    %67 = tpu.matmul %66, %9, %cst_36 {dimension_numbers = #tpu.dot_dimension_numbers<[1], [0], [0], [1], [0, 0, 1, 1], [], []>} : vector<8x128xf32>, vector<128x1xf32>, vector<8x1xf32> -> vector<8x1xf32>
    %cst_37 = arith.constant 1.000000e+00 : f32
    %68 = vector.broadcast %cst_37 : f32 to vector<8x1xf32>
    %69 = arith.select %60, %67, %68 : vector<8x1xi1>, vector<8x1xf32>
    %70 = math.rsqrt %69 : vector<8x1xf32>
    %71 = vector.broadcast %70 : vector<8x1xf32> to vector<8x128xf32>
    %72 = arith.mulf %65, %71 : vector<8x128xf32>
    %73 = vector.shape_cast %72 : vector<8x128xf32> to vector<1x8x128xf32>
    %cst_38 = arith.constant dense<0.000000e+00> : vector<8x128xf32>
    %74 = vector.multi_reduction <add>, %73, %cst_38 [0] : vector<1x8x128xf32> to vector<8x128xf32>
    %75 = arith.addf %57, %74 : vector<8x128xf32>
    %c0_39 = arith.constant 0 : index
    %c2_40 = arith.constant 2 : index
    %c0_41 = arith.constant 0 : index
    %c0_42 = arith.constant 0 : index
    %76 = vector.load %arg6[%c0_39, %c2_40, %c0_41, %c0_42] : memref<1x3x8x128xf32, #tpu.memory_space<vmem>>, vector<1x1x8x128xf32>
    %77 = vector.shape_cast %76 : vector<1x1x8x128xf32> to vector<8x128xf32>
    %78 = vector.shape_cast %75 : vector<8x128xf32> to vector<1x1x8x128xf32>
    tpu.vector_store %arg6[%c0_39, %c2_40, %c0_41, %c0_42], %78 {strides = array<i32>} : memref<1x3x8x128xf32, #tpu.memory_space<vmem>>, vector<1x1x8x128xf32>,
    return
  }
  func.func @transform_0(%arg0: i32, %arg1: i32, %arg2: memref<3xi32, #tpu.memory_space<smem>>) -> (i32, i32) {
    %c1_i32 = arith.constant 1 : i32
    %0 = arith.muli %arg0, %c1_i32 : i32
    %1 = arith.addi %0, %arg1 : i32
    %c0_i32 = arith.constant 0 : i32
    %2 = arith.minsi %1, %c0_i32 : i32
    %c0_i32_0 = arith.constant 0 : i32
    %c0_i32_1 = arith.constant 0 : i32
    return %2, %c0_i32_0 : i32, i32
  }
  func.func @transform_1(%arg0: i32, %arg1: i32, %arg2: memref<3xi32, #tpu.memory_space<smem>>) -> (i32, i32) {
    %c1_i32 = arith.constant 1 : i32
    %0 = arith.muli %arg0, %c1_i32 : i32
    %1 = arith.addi %0, %arg1 : i32
    %c0_i32 = arith.constant 0 : i32
    %2 = arith.minsi %1, %c0_i32 : i32
    %c0_i32_0 = arith.constant 0 : i32
    %c0_i32_1 = arith.constant 0 : i32
    return %2, %c0_i32_0 : i32, i32
  }
  func.func @transform_2(%arg0: i32, %arg1: i32, %arg2: memref<3xi32, #tpu.memory_space<smem>>) -> (i32, i32) {
    %c1_i32 = arith.constant 1 : i32
    %0 = arith.muli %arg0, %c1_i32 : i32
    %1 = arith.addi %0, %arg1 : i32
    %c0_i32 = arith.constant 0 : i32
    %2 = arith.minsi %1, %c0_i32 : i32
    %c0_i32_0 = arith.constant 0 : i32
    %c0_i32_1 = arith.constant 0 : i32
    return %2, %c0_i32_0 : i32, i32
  }
  func.func @transform_3(%arg0: i32, %arg1: i32, %arg2: memref<3xi32, #tpu.memory_space<smem>>) -> (i32, i32, i32, i32) {
    %c0_i32 = arith.constant 0 : i32
    %c0_i32_0 = arith.constant 0 : i32
    %c0_i32_1 = arith.constant 0 : i32
    %c0_i32_2 = arith.constant 0 : i32
    return %arg0, %c0_i32, %c0_i32_0, %c0_i32_1 : i32, i32, i32, i32
  }
}

</mosaic_0001>

<llo_original>
// kernel: tpu_custom_call.1
$region0: #{tpu_custom_call.1}
  #allocation0 [shape = 'u32[]', space=smem, size = 0x4, offset = 0x4, fixed_abs, tag = 'smem constant byte address 0x4 - core index']
  #allocation1 [shape = 'u32[144,128]{1,0:T(1,128)}', space=vmem, size = 0x12000, scoped, tag = 'internal scratch']
  #allocation2 [shape = 's32[1]{0}', space=sflag, size = 0x4, scoped, tag = 'scoped memory for tpu_custom_call.1']
  #allocation3 [shape = 'u8[512]{0}', space=smem, size = 0x200, scoped, tag = 'prefetched SMEM operand 0']
  %s0 = inlined_call_operand.hbm [shape: s32[3], index: 0, kind: input, shape index: {}]
  %s1 = inlined_call_operand.hbm [shape: f32[8,128], index: 1, kind: input, shape index: {}]
  %s2 = inlined_call_operand.hbm [shape: f32[8,128], index: 2, kind: input, shape index: {}]
  %s3 = inlined_call_operand.vmem [shape: f32[8,128], index: 3, kind: input, shape index: {}]
  %s4 = inlined_call_operand.hbm [shape: f32[1,3,8,128], index: 4, kind: output, shape index: {}]
  %s5 = sld [smem:[#allocation0]]
  $region34: #{tpu_custom_call.1} parent=0
    _
  %s7 = ssub.s32 1, %s5
  %s8 = scalar_select 0, %s7, %s5
  %10 = dma.hbm_to_smem %s0, 16, [#allocation3], [#allocation2]
  %11 = dma.done [#allocation2], 16
  %12 = sfence
  $region1: #{tpu_custom_call.1} parent=0
    #allocation4 [shape = 'u8[4096]{0}', space=vmem, size = 0x1000, scoped, tag = 'input window, operand 1, single buffered']
    #allocation5 [shape = 's32[1]{0}', space=sflag, size = 0x4, scoped, tag = 'scoped memory for tpu_custom_call.1']
    #allocation6 [shape = 's32[1]{0}', space=sflag, size = 0x4, scoped, tag = 'scoped memory for tpu_custom_call.1']
    #allocation7 [shape = 'u8[4096]{0}', space=vmem, size = 0x1000, scoped, tag = 'input window, operand 2, single buffered']
    #allocation8 [shape = 's32[1]{0}', space=sflag, size = 0x4, scoped, tag = 'scoped memory for tpu_custom_call.1']
    #allocation9 [shape = 'u8[12288]{0}', space=vmem, size = 0x3000, scoped, tag = 'output window, operand 0, single buffered']
    %13 = vsyncpa [#allocation5], 0
    %14 = vsyncpa [#allocation8], 0
    %15 = vsyncpa [#allocation6], 0
    // Predicated region
    $region2: #{tpu_custom_call.1} parent=1 // pred_check
      _
    $region3: #{tpu_custom_call.1} parent=1 // pred_check_branch
      %17 = sbr.rel (0) target = $region5
    $region4: #{tpu_custom_call.1} parent=1 // pred_region
      %s18 = sadd.s32 0, 0
      %p19 = scmp.lt.s32.totalorder %s18, 0
      %s20 = scalar_select %p19, %s18, 0
      %s22 = ssub.s32 128, 128
      %23 = vsyncadd [#allocation5], %s22
      %s24 = smul.addr %s20, 128
      %s25 = scalar_lea.hbm %s1, %s24
      %s27 = sshll.u32 [#allocation4], 4
      %s28 = int_to_ptr.vmem [resolvable:$true] %s27
      %30 = dma.hbm_to_vmem [thread:$0]  %s25, 128, %s28, [#allocation5]
    $region5: #{tpu_custom_call.1} parent=1 // pred_fallthru
      _
    // Predicated region
    $region6: #{tpu_custom_call.1} parent=1 // pred_check
      _
    $region7: #{tpu_custom_call.1} parent=1 // pred_check_branch
      %32 = sbr.rel (0) target = $region9
    $region8: #{tpu_custom_call.1} parent=1 // pred_region
      %s33 = sadd.s32 0, 0
      %p34 = scmp.lt.s32.totalorder %s33, 0
      %s35 = scalar_select %p34, %s33, 0
      %s37 = ssub.s32 128, 128
      %38 = vsyncadd [#allocation8], %s37
      %s39 = smul.addr %s35, 128
      %s40 = scalar_lea.hbm %s2, %s39
      %s42 = sshll.u32 [#allocation7], 4
      %s43 = int_to_ptr.vmem [resolvable:$true] %s42
      %45 = dma.hbm_to_vmem [thread:$0]  %s40, 128, %s43, [#allocation8]
    $region9: #{tpu_custom_call.1} parent=1 // pred_fallthru
      _
    // Predicated region
    $region10: #{tpu_custom_call.1} parent=1 // pred_check
      _
    $region11: #{tpu_custom_call.1} parent=1 // pred_check_branch
      %47 = sbr.rel (0) target = $region13
    $region12: #{tpu_custom_call.1} parent=1 // pred_region
      %s48 = sadd.s32 0, 0
      %p49 = scmp.lt.s32.totalorder %s48, 0
      %s50 = scalar_select %p49, %s48, 0
      %p51 = scmp.lt.s32.totalorder %s50, 0
      %s52 = scalar_select %p51, %s50, 0
      %s53 = smul.addr %s52, 8
      %s54 = scalar_lea.vmem %s3, %s53
      %s55 = sadd.s32 0, 0
      %p56 = scmp.lt.s32.totalorder %s55, 0
      %s57 = scalar_select %p56, %s55, 0
    $region13: #{tpu_custom_call.1} parent=1 // pred_fallthru
      _
    // Predicated region
    $region14: #{tpu_custom_call.1} parent=1 // pred_check
      _
    $region15: #{tpu_custom_call.1} parent=1 // pred_check_branch
      %59 = sbr.rel (0) target = $region17
    $region16: #{tpu_custom_call.1} parent=1 // pred_region
      %60 = dma.done [#allocation5], 128
    $region17: #{tpu_custom_call.1} parent=1 // pred_fallthru
      _
    // Predicated region
    $region18: #{tpu_custom_call.1} parent=1 // pred_check
      _
    $region19: #{tpu_custom_call.1} parent=1 // pred_check_branch
      %62 = sbr.rel (0) target = $region21
    $region20: #{tpu_custom_call.1} parent=1 // pred_region
      %63 = dma.done [#allocation8], 128
    $region21: #{tpu_custom_call.1} parent=1 // pred_fallthru
      _
    %s64 = sadd.s32 0, 0
    %p65 = scmp.lt.s32.totalorder %s64, 0
    %s66 = scalar_select %p65, %s64, 0
    %p67 = scmp.lt.s32.totalorder %s66, 0
    %s68 = scalar_select %p67, %s66, 0
    %s69 = smul.addr %s68, 8
    %s70 = scalar_lea.vmem %s3, %s69
    %s71 = sadd.s32 0, 0
    %p72 = scmp.lt.s32.totalorder %s71, 0
    %s73 = scalar_select %p72, %s71, 0
    %s74 = sadd.s32 0, 0
    %p75 = scmp.lt.s32.totalorder %s74, 0
    %s76 = scalar_select %p75, %s74, 0
    %s77 = sadd.s32 0, 0
    %p78 = scmp.lt.s32.totalorder %s77, 0
    %s79 = scalar_select %p78, %s77, 0
    %p80 = scmp.lt.s32.totalorder %s79, 0
    %s81 = scalar_select %p80, %s79, 0
    %s82 = smul.addr %s81, 8
    %s83 = scalar_lea.vmem %s3, %s82
    %s84 = sadd.s32 0, 0
    %p85 = scmp.lt.s32.totalorder %s84, 0
    %s86 = scalar_select %p85, %s84, 0
    %p87 = scmp.eq.s32.totalorder 0, 0
    // Predicated region
    $region22: #{tpu_custom_call.1} parent=1 // pred_check
      %p88 = pneg %p87
    $region23: #{tpu_custom_call.1} parent=1 // pred_check_branch
      %90 = sbr.rel (%p88) target = $region25
    $region24: #{tpu_custom_call.1} parent=1 // pred_region
      %91 = vst [vmem:[#allocation9] sm:$0xff] 0.0
      %92 = vst [vmem:[#allocation9 + $0x8] sm:$0xff] 0.0
      %93 = vst [vmem:[#allocation9 + $0x10] sm:$0xff] 0.0
    $region25: #{tpu_custom_call.1} parent=1 // pred_fallthru
      _
    %s94 = sadd.s32 0, 0
    %s95 = smul.u32 %s94, 8
    %v96 = vlaneseq
    %v97 = vshrl.u32 %v96, 7
    %v98 = vstv %s95
    %v99 = vadd.s32 %v98, %v97
    %v100 = vld [vmem:[#allocation9] sm:$0xff]
    %s101 = sld [smem:[#allocation3]]
    %v102 = vstv %s101
    %vm103 = vcmp.lt.s32.totalorder %v99, %v102
    %v104 = vld [vmem:[#allocation4] sm:$0xff]
    %v105 = vsel %vm103, 1, 0
    %vm106 = vcmp.eq.s32.totalorder %v105, 1
    %v107 = vsel %vm106, %v104, 0.0
    %v108 = vmul.f32 %v107, %v107
    %109 = vmatprep.subr.mxu0 0.0
    %110 = vmatpush1.msra.mxu0 1.0
    %111 = vmatprep.subr.mxu0 0.0
    %112 = vmatpush1.msra.mxu0 1.0
    %113 = vmatprep.subr.mxu0 0.0
    %114 = vmatpush1.msra.mxu0 1.0
    %115 = vmatprep.subr.mxu0 0.0
    %116 = vmatpush1.msra.mxu0 1.0
    %117 = vmatprep.subr.mxu0 0.0
    %118 = vmatpush1.msra.mxu0 1.0
    %119 = vmatprep.subr.mxu0 0.0
    %120 = vmatpush1.msra.mxu0 1.0
    %121 = vmatprep.subr.mxu0 0.0
    %122 = vmatpush1.msra.mxu0 1.0
    %123 = vmatprep.subr.mxu0 0.0
    %124 = vmatpush1.msra.mxu0 1.0
    %125 = vmatprep.subr.mxu0 0.0
    %126 = vmatpush1.msra.mxu0 1.0
    %127 = vmatprep.subr.mxu0 0.0
    %128 = vmatpush1.msra.mxu0 1.0
    %129 = vmatprep.subr.mxu0 0.0
    %130 = vmatpush1.msra.mxu0 1.0
    %131 = vmatprep.subr.mxu0 0.0
    %132 = vmatpush1.msra.mxu0 1.0
    %133 = vmatprep.subr.mxu0 0.0
    %134 = vmatpush1.msra.mxu0 1.0
    %135 = vmatprep.subr.mxu0 0.0
    %136 = vmatpush1.msra.mxu0 1.0
    %137 = vmatprep.subr.mxu0 0.0
    %138 = vmatpush1.msra.mxu0 1.0
    %139 = vmatprep.subr.mxu0 0.0
    %140 = vmatpush1.msra.mxu0 1.0
    %141 = vmatprep.subr.mxu0 0.0
    %142 = vmatpush1.msra.mxu0 0.0
    %143 = vmatprep.subr.mxu0 0.0
    %144 = vmatpush1.msra.mxu0 0.0
    %145 = vmatprep.subr.mxu0 0.0
    %146 = vmatpush1.msra.mxu0 0.0
    %147 = vmatprep.subr.mxu0 0.0
    %148 = vmatpush1.msra.mxu0 0.0
    %149 = vmatprep.subr.mxu0 0.0
    %150 = vmatpush1.msra.mxu0 0.0
    %151 = vmatprep.subr.mxu0 0.0
    %152 = vmatpush1.msra.mxu0 0.0
    %153 = vmatprep.subr.mxu0 0.0
    %154 = vmatpush1.msra.mxu0 0.0
    %155 = vmatprep.subr.mxu0 0.0
    %156 = vmatpush1.msra.mxu0 0.0
    %157 = vmatprep.subr.mxu0 0.0
    %158 = vmatpush1.msra.mxu0 0.0
    %159 = vmatprep.subr.mxu0 0.0
    %160 = vmatpush1.msra.mxu0 0.0
    %161 = vmatprep.subr.mxu0 0.0
    %162 = vmatpush1.msra.mxu0 0.0
    %163 = vmatprep.subr.mxu0 0.0
    %164 = vmatpush1.msra.mxu0 0.0
    %165 = vmatprep.subr.mxu0 0.0
    %166 = vmatpush1.msra.mxu0 0.0
    %167 = vmatprep.subr.mxu0 0.0
    %168 = vmatpush1.msra.mxu0 0.0
    %169 = vmatprep.subr.mxu0 0.0
    %170 = vmatpush1.msra.mxu0 0.0
    %171 = vmatprep.subr.mxu0 0.0
    %172 = vmatpush1.msra.mxu0 0.0
    %173 = vmatprep.mubr.f32.mxu0 0.0
    %174 = vmatmul.mubr.f32.gmra.mrb[0].mxu0 %v108
    %v175 = vpop.f32.mrb[0].mxu0
    %v176 = vadd.f32 0.0, %v175
    %v177 = vpop.f32.mrb[0].mxu0
    %178 = vdwg.mxu0
    %v179 = vsel %vm103, %v176, 1.0
    %v180 = vrsqrt.pop %v179
    %182 = vset.pattern.permute.xlu0 0
    %183 = vperm.xlu0 %182, %v180
    %v184 = vpop.permute.xlu0 %183
    %v186 = vmul.f32 %v107, %v184
    %v187 = vadd.f32 %v186, 0.0
    %v188 = vadd.f32 %v100, %v187
    %189 = vst [vmem:[#allocation9] sm:$0xff] %v188
    %s190 = scalar_lea.vmem [#allocation9], 8
    %v191 = vld [vmem:[%s190] sm:$0xff]
    %s192 = sld [smem:[#allocation3 + $0x1]]
    %v193 = vstv %s192
    %vm194 = vcmp.lt.s32.totalorder %v99, %v193
    %v195 = vld [vmem:[#allocation7] sm:$0xff]
    %v196 = vsel %vm194, 1, 0
    %vm197 = vcmp.eq.s32.totalorder %v196, 1
    %v198 = vsel %vm197, %v195, 0.0
    %v199 = vmul.f32 %v198, %v198
    %200 = vmatprep.subr.mxu0 0.0
    %201 = vmatpush1.msra.mxu0 1.0
    %202 = vmatprep.subr.mxu0 0.0
    %203 = vmatpush1.msra.mxu0 1.0
    %204 = vmatprep.subr.mxu0 0.0
    %205 = vmatpush1.msra.mxu0 1.0
    %206 = vmatprep.subr.mxu0 0.0
    %207 = vmatpush1.msra.mxu0 1.0
    %208 = vmatprep.subr.mxu0 0.0
    %209 = vmatpush1.msra.mxu0 1.0
    %210 = vmatprep.subr.mxu0 0.0
    %211 = vmatpush1.msra.mxu0 1.0
    %212 = vmatprep.subr.mxu0 0.0
    %213 = vmatpush1.msra.mxu0 1.0
    %214 = vmatprep.subr.mxu0 0.0
    %215 = vmatpush1.msra.mxu0 1.0
    %216 = vmatprep.subr.mxu0 0.0
    %217 = vmatpush1.msra.mxu0 1.0
    %218 = vmatprep.subr.mxu0 0.0
    %219 = vmatpush1.msra.mxu0 1.0
    %220 = vmatprep.subr.mxu0 0.0
    %221 = vmatpush1.msra.mxu0 1.0
    %222 = vmatprep.subr.mxu0 0.0
    %223 = vmatpush1.msra.mxu0 1.0
    %224 = vmatprep.subr.mxu0 0.0
    %225 = vmatpush1.msra.mxu0 1.0
    %226 = vmatprep.subr.mxu0 0.0
    %227 = vmatpush1.msra.mxu0 1.0
    %228 = vmatprep.subr.mxu0 0.0
    %229 = vmatpush1.msra.mxu0 1.0
    %230 = vmatprep.subr.mxu0 0.0
    %231 = vmatpush1.msra.mxu0 1.0
    %232 = vmatprep.subr.mxu0 0.0
    %233 = vmatpush1.msra.mxu0 0.0
    %234 = vmatprep.subr.mxu0 0.0
    %235 = vmatpush1.msra.mxu0 0.0
    %236 = vmatprep.subr.mxu0 0.0
    %237 = vmatpush1.msra.mxu0 0.0
    %238 = vmatprep.subr.mxu0 0.0
    %239 = vmatpush1.msra.mxu0 0.0
    %240 = vmatprep.subr.mxu0 0.0
    %241 = vmatpush1.msra.mxu0 0.0
    %242 = vmatprep.subr.mxu0 0.0
    %243 = vmatpush1.msra.mxu0 0.0
    %244 = vmatprep.subr.mxu0 0.0
    %245 = vmatpush1.msra.mxu0 0.0
    %246 = vmatprep.subr.mxu0 0.0
    %247 = vmatpush1.msra.mxu0 0.0
    %248 = vmatprep.subr.mxu0 0.0
    %249 = vmatpush1.msra.mxu0 0.0
    %250 = vmatprep.subr.mxu0 0.0
    %251 = vmatpush1.msra.mxu0 0.0
    %252 = vmatprep.subr.mxu0 0.0
    %253 = vmatpush1.msra.mxu0 0.0
    %254 = vmatprep.subr.mxu0 0.0
    %255 = vmatpush1.msra.mxu0 0.0
    %256 = vmatprep.subr.mxu0 0.0
    %257 = vmatpush1.msra.mxu0 0.0
    %258 = vmatprep.subr.mxu0 0.0
    %259 = vmatpush1.msra.mxu0 0.0
    %260 = vmatprep.subr.mxu0 0.0
    %261 = vmatpush1.msra.mxu0 0.0
    %262 = vmatprep.subr.mxu0 0.0
    %263 = vmatpush1.msra.mxu0 0.0
    %264 = vmatprep.mubr.f32.mxu0 0.0
    %265 = vmatmul.mubr.f32.gmra.mrb[0].mxu0 %v199
    %v266 = vpop.f32.mrb[0].mxu0
    %v267 = vadd.f32 0.0, %v266
    %v268 = vpop.f32.mrb[0].mxu0
    %269 = vdwg.mxu0
    %v270 = vsel %vm194, %v267, 1.0
    %v271 = vrsqrt.pop %v270
    %273 = vset.pattern.permute.xlu0 0
    %274 = vperm.xlu0 %273, %v271
    %v275 = vpop.permute.xlu0 %274
    %v277 = vmul.f32 %v198, %v275
    %v278 = vadd.f32 %v277, 0.0
    %v279 = vadd.f32 %v191, %v278
    %280 = vst [vmem:[%s190] sm:$0xff] %v279
    %s281 = scalar_lea.vmem [#allocation9], 16
    %v282 = vld [vmem:[%s281] sm:$0xff]
    %s283 = sld [smem:[#allocation3 + $0x2]]
    %v284 = vstv %s283
    %vm285 = vcmp.lt.s32.totalorder %v99, %v284
    %v286 = vld [vmem:[%s83] sm:$0xff]
    %v287 = vsel %vm285, 1, 0
    %vm288 = vcmp.eq.s32.totalorder %v287, 1
    %v289 = vsel %vm288, %v286, 0.0
    %v290 = vmul.f32 %v289, %v289
    %291 = vmatprep.subr.mxu0 0.0
    %292 = vmatpush1.msra.mxu0 1.0
    %293 = vmatprep.subr.mxu0 0.0
    %294 = vmatpush1.msra.mxu0 1.0
    %295 = vmatprep.subr.mxu0 0.0
    %296 = vmatpush1.msra.mxu0 1.0
    %297 = vmatprep.subr.mxu0 0.0
    %298 = vmatpush1.msra.mxu0 1.0
    %299 = vmatprep.subr.mxu0 0.0
    %300 = vmatpush1.msra.mxu0 1.0
    %301 = vmatprep.subr.mxu0 0.0
    %302 = vmatpush1.msra.mxu0 1.0
    %303 = vmatprep.subr.mxu0 0.0
    %304 = vmatpush1.msra.mxu0 1.0
    %305 = vmatprep.subr.mxu0 0.0
    %306 = vmatpush1.msra.mxu0 1.0
    %307 = vmatprep.subr.mxu0 0.0
    %308 = vmatpush1.msra.mxu0 1.0
    %309 = vmatprep.subr.mxu0 0.0
    %310 = vmatpush1.msra.mxu0 1.0
    %311 = vmatprep.subr.mxu0 0.0
    %312 = vmatpush1.msra.mxu0 1.0
    %313 = vmatprep.subr.mxu0 0.0
    %314 = vmatpush1.msra.mxu0 1.0
    %315 = vmatprep.subr.mxu0 0.0
    %316 = vmatpush1.msra.mxu0 1.0
    %317 = vmatprep.subr.mxu0 0.0
    %318 = vmatpush1.msra.mxu0 1.0
    %319 = vmatprep.subr.mxu0 0.0
    %320 = vmatpush1.msra.mxu0 1.0
    %321 = vmatprep.subr.mxu0 0.0
    %322 = vmatpush1.msra.mxu0 1.0
    %323 = vmatprep.subr.mxu0 0.0
    %324 = vmatpush1.msra.mxu0 0.0
    %325 = vmatprep.subr.mxu0 0.0
    %326 = vmatpush1.msra.mxu0 0.0
    %327 = vmatprep.subr.mxu0 0.0
    %328 = vmatpush1.msra.mxu0 0.0
    %329 = vmatprep.subr.mxu0 0.0
    %330 = vmatpush1.msra.mxu0 0.0
    %331 = vmatprep.subr.mxu0 0.0
    %332 = vmatpush1.msra.mxu0 0.0
    %333 = vmatprep.subr.mxu0 0.0
    %334 = vmatpush1.msra.mxu0 0.0
    %335 = vmatprep.subr.mxu0 0.0
    %336 = vmatpush1.msra.mxu0 0.0
    %337 = vmatprep.subr.mxu0 0.0
    %338 = vmatpush1.msra.mxu0 0.0
    %339 = vmatprep.subr.mxu0 0.0
    %340 = vmatpush1.msra.mxu0 0.0
    %341 = vmatprep.subr.mxu0 0.0
    %342 = vmatpush1.msra.mxu0 0.0
    %343 = vmatprep.subr.mxu0 0.0
    %344 = vmatpush1.msra.mxu0 0.0
    %345 = vmatprep.subr.mxu0 0.0
    %346 = vmatpush1.msra.mxu0 0.0
    %347 = vmatprep.subr.mxu0 0.0
    %348 = vmatpush1.msra.mxu0 0.0
    %349 = vmatprep.subr.mxu0 0.0
    %350 = vmatpush1.msra.mxu0 0.0
    %351 = vmatprep.subr.mxu0 0.0
    %352 = vmatpush1.msra.mxu0 0.0
    %353 = vmatprep.subr.mxu0 0.0
    %354 = vmatpush1.msra.mxu0 0.0
    %355 = vmatprep.mubr.f32.mxu0 0.0
    %356 = vmatmul.mubr.f32.gmra.mrb[0].mxu0 %v290
    %v357 = vpop.f32.mrb[0].mxu0
    %v358 = vadd.f32 0.0, %v357
    %v359 = vpop.f32.mrb[0].mxu0
    %360 = vdwg.mxu0
    %v361 = vsel %vm285, %v358, 1.0
    %v362 = vrsqrt.pop %v361
    %364 = vset.pattern.permute.xlu0 0
    %365 = vperm.xlu0 %364, %v362
    %v366 = vpop.permute.xlu0 %365
    %v368 = vmul.f32 %v289, %v366
    %v369 = vadd.f32 %v368, 0.0
    %v370 = vadd.f32 %v282, %v369
    %371 = vst [vmem:[%s281] sm:$0xff] %v370
    // Predicated region
    $region26: #{tpu_custom_call.1} parent=1 // pred_check
      _
    $region27: #{tpu_custom_call.1} parent=1 // pred_check_branch
      %373 = sbr.rel (0) target = $region29
    $region28: #{tpu_custom_call.1} parent=1 // pred_region
      %s375 = ssub.s32 384, 384
      %376 = vsyncadd [#allocation6], %s375
      %s377 = sshll.u32 [#allocation9], 4
      %s378 = int_to_ptr.vmem [resolvable:$true] %s377
      %383 = dma.vmem_to_hbm [thread:$0]  %s378, 384, %s4, [#allocation6], 128, 128, 8
    $region29: #{tpu_custom_call.1} parent=1 // pred_fallthru
      _
    // Predicated region
    $region30: #{tpu_custom_call.1} parent=1 // pred_check
      _
    $region31: #{tpu_custom_call.1} parent=1 // pred_check_branch
      %385 = sbr.rel (0) target = $region33
    $region32: #{tpu_custom_call.1} parent=1 // pred_region
      %386 = dma.done [#allocation6], 384
    $region33: #{tpu_custom_call.1} parent=1 // pred_fallthru
      _
    %387 = vsyncpa [#allocation5], 1
    %388 = vsyncpa [#allocation8], 1
    %389 = vsyncpa [#allocation6], 1

</llo_original>
